<compile_context>
chip_gen: v7x
topology: tpu7x:2x2x1
jax: 0.10.0
libtpu: 0.0.40
codegen_flags: <defaults>
</compile_context>

<pallas_src>
import functools
import math

import jax
import jax.numpy as jnp
from jax.experimental import pallas as pl
from jax.experimental.pallas import tpu as pltpu


# ---------------------------------------------------------------------------
# Tiled projection matmul (bf16 MXU operands, f32 VMEM accumulator)
# ---------------------------------------------------------------------------
def _matmul_kernel(x_ref, w_ref, o_ref, acc_ref):
    @pl.when(pl.program_id(2) == 0)
    def _():
        acc_ref[...] = jnp.zeros_like(acc_ref)

    acc_ref[...] += jnp.dot(x_ref[...], w_ref[...],
                            preferred_element_type=jnp.float32)

    @pl.when(pl.program_id(2) == pl.num_programs(2) - 1)
    def _():
        o_ref[...] = acc_ref[...].astype(o_ref.dtype)


def pallas_matmul(x, w, out_dtype=jnp.float32, tm=512, tn=512, tk=1024):
    m, k = x.shape
    k2, n = w.shape
    assert k == k2
    # gcd-fit the tiles: they always divide exactly, so no garbage from a
    # K-remainder block can ever be accumulated (review correctness concern).
    tm, tn, tk = math.gcd(m, tm), math.gcd(n, tn), math.gcd(k, tk)
    return pl.pallas_call(
        _matmul_kernel,
        grid=(m // tm, n // tn, k // tk),
        in_specs=[
            pl.BlockSpec((tm, tk), lambda i, j, kk: (i, kk)),
            pl.BlockSpec((tk, tn), lambda i, j, kk: (kk, j)),
        ],
        out_specs=pl.BlockSpec((tm, tn), lambda i, j, kk: (i, j)),
        out_shape=jax.ShapeDtypeStruct((m, n), out_dtype),
        scratch_shapes=[pltpu.VMEM((tm, tn), jnp.float32)],
        compiler_params=pltpu.CompilerParams(
            dimension_semantics=("parallel", "parallel", "arbitrary"),
            vmem_limit_bytes=32 * 1024 * 1024),
    )(x, w)


# ---------------------------------------------------------------------------
# Fused relative attention: AC + BD + rel_shift + softmax + P@V + head merge
# ---------------------------------------------------------------------------
def _fused_attn_kernel(q_ref, qn_ref, kv_ref, rk_ref, rwb_ref, rrb_ref, o_ref,
                       *, scale, n_head, d_head, q_tile):
    tq = q_tile
    klen = kv_ref.shape[0]
    rlen = rk_ref.shape[0]
    h = n_head * d_head
    q0 = pl.program_id(1) * tq                    # global query offset of tile

    row = jax.lax.broadcasted_iota(jnp.int32, (tq, klen), 0)   # local row
    col = jax.lax.broadcasted_iota(jnp.int32, (tq, klen), 1)   # key index
    grow = row + q0                                            # global row

    dn = (((1,), (1,)), ((), ()))                  # contract dim 1 vs dim 1
    outs = []
    for hd in range(n_head):                       # static unroll over heads
        c0, c1 = hd * d_head, (hd + 1) * d_head
        qh = q_ref[:, c0:c1].astype(jnp.float32)           # (TQ, D)
        qn = qn_ref[0:1, c0:c1].astype(jnp.float32)        # (1, D) next tile's row 0
        rwb = rwb_ref[:, c0:c1]                            # (1, D) f32
        rrb = rrb_ref[:, c0:c1]                            # (1, D) f32
        kh = kv_ref[:, c0:c1]                              # (K, D) bf16
        vh = kv_ref[:, h + c0:h + c1]                      # (K, D) bf16
        rkh = rk_ref[:, c0:c1]                             # (R, D) bf16

        # Fold 1/sqrt(d_head) into q (Q*D multiplies instead of Q*K).
        qw = ((qh + rwb) * scale).astype(jnp.bfloat16)
        qr = ((qh + rrb) * scale).astype(jnp.bfloat16)
        qrn = ((qn + rrb) * scale).astype(jnp.bfloat16)

        ac = jax.lax.dot_general(qw, kh, dn,
                                 preferred_element_type=jnp.float32)   # (TQ, K)
        bd = jax.lax.dot_general(qr, rkh, dn,
                                 preferred_element_type=jnp.float32)   # (TQ, R)
        bdn = jax.lax.dot_general(qrn, rkh, dn,
                                  preferred_element_type=jnp.float32)  # (1, R)

        # Exact PyTorch _rel_shift for this q tile (zero_triu=False):
        #   shifted[i, j] = BD[i, j + klen-1-i]   if j <= i
        #                 = 0                      if j == i+1
        #                 = BD[i+1, j-i-2]         if j >= i+2
        # Row i rolled right by i+1 gives both the j<=i part (own row) and the
        # j>=i+2 part (next row), so one strided XLU rotate + two selects.
        rolled = pltpu.roll(bd, shift=q0 + 1, axis=1, stride=1, stride_axis=0)
        nxt = pltpu.roll(rolled, shift=tq - 1, axis=0)     # nxt[a] = rolled[a+1]
        nxt_last = pltpu.roll(bdn, shift=(q0 + tq + 1) % rlen, axis=1)
        nxt = jnp.where(row == tq - 1, nxt_last, nxt)      # cross-tile row
        bd_sh = jnp.where(col <= grow, rolled,
                          jnp.where(col == grow + 1, 0.0, nxt))

        # Softmax over keys (f32 exp; denominator via EUP approx reciprocal).
        s = ac + bd_sh
        s = s - jnp.max(s, axis=-1, keepdims=True)
        e = jnp.exp(s)
        p = (e * pl.reciprocal(jnp.sum(e, axis=-1, keepdims=True), approx=True)
             ).astype(jnp.bfloat16)
        outs.append(jnp.dot(p, vh, preferred_element_type=jnp.float32))  # (TQ, D)

    # Single lane-dense head-merged (TQ, n_head*d_head) store.
    o_ref[...] = jnp.concatenate(outs, axis=-1).astype(o_ref.dtype)


def fused_rel_attention(q3, kv3, rk, rwb, rrb, scale, n_head, d_head, q_tile):
    b, qlen, h = q3.shape
    klen = kv3.shape[1]
    rlen = rk.shape[0]
    assert klen == qlen and rlen == qlen, "covered path: no mems / past keys"
    assert qlen % q_tile == 0
    nq = qlen // q_tile

    kern = functools.partial(_fused_attn_kernel, scale=scale, n_head=n_head,
                             d_head=d_head, q_tile=q_tile)
    return pl.pallas_call(
        kern,
        grid=(b, nq),
        in_specs=[
            # this q tile
            pl.BlockSpec((None, q_tile, h), lambda bi, qi: (bi, qi, 0)),
            # next q tile (only its first row is used, for the rel_shift wrap)
            pl.BlockSpec((None, q_tile, h), lambda bi, qi: (bi, (qi + 1) % nq, 0)),
            # k | v for the whole key range (index map is qi-invariant ->
            # DMA'd once per batch, reused across q tiles)
            pl.BlockSpec((None, klen, 2 * h), lambda bi, qi: (bi, 0, 0)),
            pl.BlockSpec((rlen, h), lambda bi, qi: (0, 0)),   # rel keys
            pl.BlockSpec((1, h), lambda bi, qi: (0, 0)),      # r_w_bias
            pl.BlockSpec((1, h), lambda bi, qi: (0, 0)),      # r_r_bias
        ],
        out_specs=pl.BlockSpec((None, q_tile, h), lambda bi, qi: (bi, qi, 0)),
        out_shape=jax.ShapeDtypeStruct((b, qlen, h), jnp.bfloat16),
        compiler_params=pltpu.CompilerParams(
            dimension_semantics=("parallel", "parallel"),
            vmem_limit_bytes=32 * 1024 * 1024),
    )(q3, q3, kv3, rk, rwb, rrb)


# ---------------------------------------------------------------------------
# Output projection + residual + LayerNorm (row-tiled, bf16 MXU operands)
# ---------------------------------------------------------------------------
def _out_ln_kernel(av_ref, wo_ref, res_ref, g_ref, b_ref, o_ref, *, eps):
    attn_out = jnp.dot(av_ref[...], wo_ref[...],
                       preferred_element_type=jnp.float32)
    x = res_ref[...] + attn_out
    mean = jnp.mean(x, axis=-1, keepdims=True)
    var = jnp.mean(jnp.square(x - mean), axis=-1, keepdims=True)
    o_ref[...] = (x - mean) * jax.lax.rsqrt(var + eps) * g_ref[...] + b_ref[...]


def out_proj_layernorm(av, wo_t, resid, gamma, beta, tm=512, eps=1e-5):
    m, h = av.shape
    d_model = wo_t.shape[1]
    tm = math.gcd(m, tm)
    return pl.pallas_call(
        functools.partial(_out_ln_kernel, eps=eps),
        grid=(m // tm,),
        in_specs=[
            pl.BlockSpec((tm, h), lambda i: (i, 0)),
            pl.BlockSpec((h, d_model), lambda i: (0, 0)),
            pl.BlockSpec((tm, d_model), lambda i: (i, 0)),
            pl.BlockSpec((1, d_model), lambda i: (0, 0)),
            pl.BlockSpec((1, d_model), lambda i: (0, 0)),
        ],
        out_specs=pl.BlockSpec((tm, d_model), lambda i: (i, 0)),
        out_shape=jax.ShapeDtypeStruct((m, d_model), jnp.float32),
        compiler_params=pltpu.CompilerParams(
            dimension_semantics=("parallel",),
            vmem_limit_bytes=32 * 1024 * 1024),
    )(av, wo_t, resid, gamma.reshape(1, -1), beta.reshape(1, -1))


# ---------------------------------------------------------------------------
# Forward wrapper (keeps PyTorch's (qlen, bsz, d_model) I/O convention)
# ---------------------------------------------------------------------------
def rel_attn_forward(w, r, r_w_bias, r_r_bias, params, q_tile=None):
    qlen, bsz, d_model = w.shape
    rlen = r.shape[0]
    n_head, d_head = r_w_bias.shape
    h = n_head * d_head
    scale = 1.0 / (d_head ** 0.5)
    assert rlen == qlen, "covered path: no mems / past keys (klen==qlen==rlen)"
    if q_tile is None:
        q_tile = math.gcd(qlen, 128)

    # Batch-major rows so every row-tiled kernel reads contiguous per-batch
    # blocks (the only layout ops left are on the d_model-wide tensors).
    wt = jnp.transpose(w, (1, 0, 2))                          # (B, Q, Dm)
    w2d = wt.reshape(bsz * qlen, d_model)                     # residual (f32)
    x_bf = w2d.astype(jnp.bfloat16)

    # Weights cast to bf16 once; the qkv projection is split into q / (k|v)
    # so the attention kernel can slice heads directly (no 5-D transpose).
    wqkv_t = params["w_qkv"].T
    wq_t = wqkv_t[:, :h].astype(jnp.bfloat16)                 # (Dm, H)
    wkv_t = wqkv_t[:, h:].astype(jnp.bfloat16)                # (Dm, 2H)
    wr_t = params["w_r"].T.astype(jnp.bfloat16)               # (Dm, H)
    wo_t = params["w_o"].T.astype(jnp.bfloat16)               # (H, Dm)

    q2d = pallas_matmul(x_bf, wq_t, out_dtype=jnp.bfloat16)       # (B*Q, H)
    kv2d = pallas_matmul(x_bf, wkv_t, out_dtype=jnp.bfloat16)     # (B*Q, 2H)
    rk = pallas_matmul(r.astype(jnp.bfloat16), wr_t,
                       out_dtype=jnp.bfloat16)                    # (R, H)

    q3 = q2d.reshape(bsz, qlen, h)                             # pure reshape
    kv3 = kv2d.reshape(bsz, qlen, 2 * h)                       # pure reshape

    av = fused_rel_attention(
        q3, kv3, rk,
        r_w_bias.reshape(1, h).astype(jnp.float32),
        r_r_bias.reshape(1, h).astype(jnp.float32),
        scale, n_head, d_head, q_tile)                         # (B, Q, H) bf16

    out2d = out_proj_layernorm(av.reshape(bsz * qlen, h), wo_t, w2d,
                               params["gamma"], params["beta"])  # (B*Q, Dm)
    return out2d.reshape(bsz, qlen, d_model).transpose(1, 0, 2)


# ---------------------------------------------------------------------------
# Pure-JAX f32 reference (mirrors the PyTorch forward) for the self-check
# ---------------------------------------------------------------------------
def reference_forward(w, r, r_w_bias, r_r_bias, params):
    qlen, bsz, d_model = w.shape
    rlen = r.shape[0]
    n_head, d_head = r_w_bias.shape
    w_heads = jnp.dot(w, params["w_qkv"].T, precision=jax.lax.Precision.HIGHEST)
    r_head_k = jnp.dot(r, params["w_r"].T, precision=jax.lax.Precision.HIGHEST)
    q, k, v = jnp.split(w_heads, 3, axis=-1)
    q = q.reshape(qlen, bsz, n_head, d_head)
    k = k.reshape(qlen, bsz, n_head, d_head)
    v = v.reshape(qlen, bsz, n_head, d_head)
    rk = r_head_k.reshape(rlen, n_head, d_head)
    ac = jnp.einsum("ibnd,jbnd->ijbn", q + r_w_bias, k)
    bd = jnp.einsum("ibnd,jnd->ijbn", q + r_r_bias, rk)
    zp = jnp.zeros((qlen, 1, bsz, n_head), bd.dtype)
    bdp = jnp.concatenate([zp, bd], axis=1).reshape(rlen + 1, qlen, bsz, n_head)
    bd = bdp[1:].reshape(qlen, rlen, bsz, n_head)
    score = (ac + bd) * (1.0 / d_head ** 0.5)
    prob = jax.nn.softmax(score, axis=1)
    av = jnp.einsum("ijbn,jbnd->ibnd", prob, v)
    av = av.reshape(qlen, bsz, n_head * d_head)
    attn_out = jnp.dot(av, params["w_o"].T)
    x = w + attn_out
    mean = x.mean(-1, keepdims=True)
    var = ((x - mean) ** 2).mean(-1, keepdims=True)
    return (x - mean) / jnp.sqrt(var + 1e-5) * params["gamma"] + params["beta"]


# ---------------------------------------------------------------------------
if __name__ == "__main__":
    # Small but TPU-friendly shapes; q_tile=64 exercises the cross-q-tile
    # rel_shift path (two q tiles per batch).
    qlen, bsz, d_model, n_head, d_head = 128, 2, 128, 4, 32
    rlen = qlen  # no mems: klen == qlen == rlen
    h = n_head * d_head

    key = jax.random.PRNGKey(0)
    ks = jax.random.split(key, 9)
    w = jax.random.normal(ks[0], (qlen, bsz, d_model), jnp.float32)
    r = jax.random.normal(ks[1], (rlen, d_model), jnp.float32)
    r_w_bias = 0.1 * jax.random.normal(ks[2], (n_head, d_head), jnp.float32)
    r_r_bias = 0.1 * jax.random.normal(ks[3], (n_head, d_head), jnp.float32)

    params = {
        "w_qkv": 0.1 * jax.random.normal(ks[4], (3 * h, d_model), jnp.float32),
        "w_r": 0.1 * jax.random.normal(ks[5], (h, d_model), jnp.float32),
        "w_o": 0.1 * jax.random.normal(ks[6], (d_model, h), jnp.float32),
        "gamma": jnp.ones((d_model,), jnp.float32)
                 + 0.1 * jax.random.normal(ks[7], (d_model,), jnp.float32),
        "beta": 0.1 * jax.random.normal(ks[8], (d_model,), jnp.float32),
    }

    out = rel_attn_forward(w, r, r_w_bias, r_r_bias, params, q_tile=64)
    out = jax.block_until_ready(out)

    ref = reference_forward(w, r, r_w_bias, r_r_bias, params)
    assert out.shape == (qlen, bsz, d_model)
    err = float(jnp.max(jnp.abs(out - ref)))
    # bf16 MXU operands / bf16 intermediates + approx reciprocal vs pure-f32
    # reference -> loosened max-abs tolerance.
    assert err < 8e-2, f"max abs err {err}"
    print("KERNEL_OK")
</pallas_src>

<mosaic_0001>
module attributes {stable_mosaic.version = 11 : i64} {
  func.func @_matmul_kernel(%arg0: i32, %arg1: i32, %arg2: i32, %arg3: memref<256x128xbf16, #tpu.memory_space<vmem>>, %arg4: memref<128x128xbf16, #tpu.memory_space<vmem>>, %arg5: memref<256x128xbf16, #tpu.memory_space<vmem>>, %arg6: memref<256x128xf32, #tpu.memory_space<vmem>>) attributes {dimension_semantics = [#tpu.dimension_semantics<parallel>, #tpu.dimension_semantics<parallel>, #tpu.dimension_semantics<arbitrary>], iteration_bounds = array<i64: 1, 1, 1>, scalar_prefetch = 0 : i64, scratch_operands = 1 : i64, tpu.core_type = #tpu.core_type<tc>, window_params = [{transform_indices = @transform_0, window_bounds = array<i64: 256, 128>}, {transform_indices = @transform_1, window_bounds = array<i64: 128, 128>}, {transform_indices = @transform_2, window_bounds = array<i64: 256, 128>}]} {
    %c0_i32 = arith.constant 0 : i32
    %0 = arith.cmpi eq, %arg2, %c0_i32 : i32
    %1 = arith.extui %0 : i1 to i32
    %c0_i32_0 = arith.constant 0 : i32
    %2 = arith.cmpi ne, %1, %c0_i32_0 : i32
    scf.if %2 {
      %cst_10 = arith.constant 0.000000e+00 : f32
      %12 = vector.broadcast %cst_10 : f32 to vector<256x128xf32>
      %c0_11 = arith.constant 0 : index
      %c0_12 = arith.constant 0 : index
      %13 = vector.load %arg6[%c0_11, %c0_12] : memref<256x128xf32, #tpu.memory_space<vmem>>, vector<256x128xf32>
      tpu.vector_store %arg6[%c0_11, %c0_12], %12 {strides = array<i32>} : memref<256x128xf32, #tpu.memory_space<vmem>>, vector<256x128xf32>,
    } else {
    }
    %c0 = arith.constant 0 : index
    %c0_1 = arith.constant 0 : index
    %3 = vector.load %arg6[%c0, %c0_1] : memref<256x128xf32, #tpu.memory_space<vmem>>, vector<256x128xf32>
    %c0_2 = arith.constant 0 : index
    %c0_3 = arith.constant 0 : index
    %4 = vector.load %arg3[%c0_2, %c0_3] : memref<256x128xbf16, #tpu.memory_space<vmem>>, vector<256x128xbf16>
    %c0_4 = arith.constant 0 : index
    %c0_5 = arith.constant 0 : index
    %5 = vector.load %arg4[%c0_4, %c0_5] : memref<128x128xbf16, #tpu.memory_space<vmem>>, vector<128x128xbf16>
    %cst = arith.constant dense<0.000000e+00> : vector<256x128xf32>
    %6 = tpu.matmul %4, %5, %cst {dimension_numbers = #tpu.dot_dimension_numbers<[1], [0], [0], [1], [0, 0, 1, 1], [], []>} : vector<256x128xbf16>, vector<128x128xbf16>, vector<256x128xf32> -> vector<256x128xf32>
    %7 = arith.addf %3, %6 : vector<256x128xf32>
    %c0_6 = arith.constant 0 : index
    %c0_7 = arith.constant 0 : index
    %8 = vector.load %arg6[%c0_6, %c0_7] : memref<256x128xf32, #tpu.memory_space<vmem>>, vector<256x128xf32>
    tpu.vector_store %arg6[%c0_6, %c0_7], %7 {strides = array<i32>} : memref<256x128xf32, #tpu.memory_space<vmem>>, vector<256x128xf32>,
    %c0_i32_8 = arith.constant 0 : i32
    %9 = arith.cmpi eq, %arg2, %c0_i32_8 : i32
    %10 = arith.extui %9 : i1 to i32
    %c0_i32_9 = arith.constant 0 : i32
    %11 = arith.cmpi ne, %10, %c0_i32_9 : i32
    scf.if %11 {
      %c0_10 = arith.constant 0 : index
      %c0_11 = arith.constant 0 : index
      %12 = vector.load %arg6[%c0_10, %c0_11] : memref<256x128xf32, #tpu.memory_space<vmem>>, vector<256x128xf32>
      %13 = arith.truncf %12 : vector<256x128xf32> to vector<256x128xbf16>
      %c0_12 = arith.constant 0 : index
      %c0_13 = arith.constant 0 : index
      %14 = vector.load %arg5[%c0_12, %c0_13] : memref<256x128xbf16, #tpu.memory_space<vmem>>, vector<256x128xbf16>
      tpu.vector_store %arg5[%c0_12, %c0_13], %13 {strides = array<i32>} : memref<256x128xbf16, #tpu.memory_space<vmem>>, vector<256x128xbf16>,
    } else {
    }
    return
  }
  func.func @transform_0(%arg0: i32, %arg1: i32, %arg2: i32) -> (i32, i32) {
    %c0_i32 = arith.constant 0 : i32
    return %arg0, %arg2 : i32, i32
  }
  func.func @transform_1(%arg0: i32, %arg1: i32, %arg2: i32) -> (i32, i32) {
    %c0_i32 = arith.constant 0 : i32
    return %arg2, %arg1 : i32, i32
  }
  func.func @transform_2(%arg0: i32, %arg1: i32, %arg2: i32) -> (i32, i32) {
    %c0_i32 = arith.constant 0 : i32
    return %arg0, %arg1 : i32, i32
  }
}

</mosaic_0001>

<llo_original>
// kernel: tpu_custom_call.1
$region0: #{tpu_custom_call.1}
  #allocation0 [shape = 'u32[]', space=smem, size = 0x4, offset = 0x4, fixed_abs, tag = 'smem constant byte address 0x4 - core index']
  #allocation1 [shape = 'u32[144,128]{1,0:T(1,128)}', space=vmem, size = 0x12000, scoped, tag = 'internal scratch']
  #allocation2 [shape = 'f32[256,128]{1,0:T(8,128)}', space=vmem, size = 0x20000, scoped, tag = 'scratch operand']
  %s0 = inlined_call_operand.hbm [shape: bf16[256,128], index: 0, kind: input, shape index: {}]
  %s1 = inlined_call_operand.hbm [shape: bf16[128,128], index: 1, kind: input, shape index: {}]
  %s2 = inlined_call_operand.hbm [shape: bf16[256,128], index: 2, kind: output, shape index: {}]
  %s3 = sld [smem:[#allocation0]]
  $region34: #{tpu_custom_call.1} parent=0
    _
  %s5 = ssub.s32 1, %s3
  %s6 = scalar_select 0, %s5, %s3
  $region1: #{tpu_custom_call.1} parent=0
    #allocation3 [shape = 'u8[65536]{0}', space=vmem, size = 0x10000, scoped, tag = 'input window, operand 0, single buffered']
    #allocation4 [shape = 's32[1]{0}', space=sflag, size = 0x4, scoped, tag = 'scoped memory for tpu_custom_call.1']
    #allocation5 [shape = 's32[1]{0}', space=sflag, size = 0x4, scoped, tag = 'scoped memory for tpu_custom_call.1']
    #allocation6 [shape = 'u8[32768]{0}', space=vmem, size = 0x8000, scoped, tag = 'input window, operand 1, single buffered']
    #allocation7 [shape = 's32[1]{0}', space=sflag, size = 0x4, scoped, tag = 'scoped memory for tpu_custom_call.1']
    #allocation8 [shape = 'u8[65536]{0}', space=vmem, size = 0x10000, scoped, tag = 'output window, operand 0, single buffered']
    %7 = vsyncpa [#allocation4], 0
    %8 = vsyncpa [#allocation7], 0
    %9 = vsyncpa [#allocation5], 0
    // Predicated region
    $region2: #{tpu_custom_call.1} parent=1 // pred_check
      _
    $region3: #{tpu_custom_call.1} parent=1 // pred_check_branch
      %11 = sbr.rel (0) target = $region5
    $region4: #{tpu_custom_call.1} parent=1 // pred_region
      %s13 = ssub.s32 2048, 2048
      %14 = vsyncadd [#allocation4], %s13
      %s15 = sshll.u32 [#allocation3], 4
      %s16 = int_to_ptr.vmem [resolvable:$true] %s15
      %21 = dma.hbm_to_vmem [thread:$0]  %s0, 2048, %s16, [#allocation4], 64, 64, 4
    $region5: #{tpu_custom_call.1} parent=1 // pred_fallthru
      _
    // Predicated region
    $region6: #{tpu_custom_call.1} parent=1 // pred_check
      _
    $region7: #{tpu_custom_call.1} parent=1 // pred_check_branch
      %23 = sbr.rel (0) target = $region9
    $region8: #{tpu_custom_call.1} parent=1 // pred_region
      %s25 = ssub.s32 1024, 1024
      %26 = vsyncadd [#allocation7], %s25
      %s27 = sshll.u32 [#allocation6], 4
      %s28 = int_to_ptr.vmem [resolvable:$true] %s27
      %33 = dma.hbm_to_vmem [thread:$0]  %s1, 1024, %s28, [#allocation7], 64, 64, 4
    $region9: #{tpu_custom_call.1} parent=1 // pred_fallthru
      _
    // Predicated region
    $region10: #{tpu_custom_call.1} parent=1 // pred_check
      _
    $region11: #{tpu_custom_call.1} parent=1 // pred_check_branch
      %35 = sbr.rel (0) target = $region13
    $region12: #{tpu_custom_call.1} parent=1 // pred_region
      %36 = dma.done [#allocation4], 2048
    $region13: #{tpu_custom_call.1} parent=1 // pred_fallthru
      _
    // Predicated region
    $region14: #{tpu_custom_call.1} parent=1 // pred_check
      _
    $region15: #{tpu_custom_call.1} parent=1 // pred_check_branch
      %38 = sbr.rel (0) target = $region17
    $region16: #{tpu_custom_call.1} parent=1 // pred_region
      %39 = dma.done [#allocation7], 1024
    $region17: #{tpu_custom_call.1} parent=1 // pred_fallthru
      _
    %p41 = scmp.eq.s32.totalorder 0, 0
    // Predicated region
    $region18: #{tpu_custom_call.1} parent=1 // pred_check
      %p42 = pneg %p41
    $region19: #{tpu_custom_call.1} parent=1 // pred_check_branch
      %44 = sbr.rel (%p42) target = $region21
    $region20: #{tpu_custom_call.1} parent=1 // pred_region
      %45 = vst [vmem:[#allocation2] sm:$0xff] 0.0
      %46 = vst [vmem:[#allocation2 + $0x8] sm:$0xff] 0.0
      %47 = vst [vmem:[#allocation2 + $0x10] sm:$0xff] 0.0
      %48 = vst [vmem:[#allocation2 + $0x18] sm:$0xff] 0.0
      %49 = vst [vmem:[#allocation2 + $0x20] sm:$0xff] 0.0
      %50 = vst [vmem:[#allocation2 + $0x28] sm:$0xff] 0.0
      %51 = vst [vmem:[#allocation2 + $0x30] sm:$0xff] 0.0
      %52 = vst [vmem:[#allocation2 + $0x38] sm:$0xff] 0.0
      %53 = vst [vmem:[#allocation2 + $0x40] sm:$0xff] 0.0
      %54 = vst [vmem:[#allocation2 + $0x48] sm:$0xff] 0.0
      %55 = vst [vmem:[#allocation2 + $0x50] sm:$0xff] 0.0
      %56 = vst [vmem:[#allocation2 + $0x58] sm:$0xff] 0.0
      %57 = vst [vmem:[#allocation2 + $0x60] sm:$0xff] 0.0
      %58 = vst [vmem:[#allocation2 + $0x68] sm:$0xff] 0.0
      %59 = vst [vmem:[#allocation2 + $0x70] sm:$0xff] 0.0
      %60 = vst [vmem:[#allocation2 + $0x78] sm:$0xff] 0.0
      %61 = vst [vmem:[#allocation2 + $0x80] sm:$0xff] 0.0
      %62 = vst [vmem:[#allocation2 + $0x88] sm:$0xff] 0.0
      %63 = vst [vmem:[#allocation2 + $0x90] sm:$0xff] 0.0
      %64 = vst [vmem:[#allocation2 + $0x98] sm:$0xff] 0.0
      %65 = vst [vmem:[#allocation2 + $0xa0] sm:$0xff] 0.0
      %66 = vst [vmem:[#allocation2 + $0xa8] sm:$0xff] 0.0
      %67 = vst [vmem:[#allocation2 + $0xb0] sm:$0xff] 0.0
      %68 = vst [vmem:[#allocation2 + $0xb8] sm:$0xff] 0.0
      %69 = vst [vmem:[#allocation2 + $0xc0] sm:$0xff] 0.0
      %70 = vst [vmem:[#allocation2 + $0xc8] sm:$0xff] 0.0
      %71 = vst [vmem:[#allocation2 + $0xd0] sm:$0xff] 0.0
      %72 = vst [vmem:[#allocation2 + $0xd8] sm:$0xff] 0.0
      %73 = vst [vmem:[#allocation2 + $0xe0] sm:$0xff] 0.0
      %74 = vst [vmem:[#allocation2 + $0xe8] sm:$0xff] 0.0
      %75 = vst [vmem:[#allocation2 + $0xf0] sm:$0xff] 0.0
      %76 = vst [vmem:[#allocation2 + $0xf8] sm:$0xff] 0.0
    $region21: #{tpu_custom_call.1} parent=1 // pred_fallthru
      _
    %v77 = vld [vmem:[#allocation2] sm:$0xff]
    %v78 = vld [vmem:[#allocation2 + $0x8] sm:$0xff]
    %v79 = vld [vmem:[#allocation2 + $0x10] sm:$0xff]
    %v80 = vld [vmem:[#allocation2 + $0x18] sm:$0xff]
    %v81 = vld [vmem:[#allocation2 + $0x20] sm:$0xff]
    %v82 = vld [vmem:[#allocation2 + $0x28] sm:$0xff]
    %v83 = vld [vmem:[#allocation2 + $0x30] sm:$0xff]
    %v84 = vld [vmem:[#allocation2 + $0x38] sm:$0xff]
    %v85 = vld [vmem:[#allocation2 + $0x40] sm:$0xff]
    %v86 = vld [vmem:[#allocation2 + $0x48] sm:$0xff]
    %v87 = vld [vmem:[#allocation2 + $0x50] sm:$0xff]
    %v88 = vld [vmem:[#allocation2 + $0x58] sm:$0xff]
    %v89 = vld [vmem:[#allocation2 + $0x60] sm:$0xff]
    %v90 = vld [vmem:[#allocation2 + $0x68] sm:$0xff]
    %v91 = vld [vmem:[#allocation2 + $0x70] sm:$0xff]
    %v92 = vld [vmem:[#allocation2 + $0x78] sm:$0xff]
    %v93 = vld [vmem:[#allocation2 + $0x80] sm:$0xff]
    %v94 = vld [vmem:[#allocation2 + $0x88] sm:$0xff]
    %v95 = vld [vmem:[#allocation2 + $0x90] sm:$0xff]
    %v96 = vld [vmem:[#allocation2 + $0x98] sm:$0xff]
    %v97 = vld [vmem:[#allocation2 + $0xa0] sm:$0xff]
    %v98 = vld [vmem:[#allocation2 + $0xa8] sm:$0xff]
    %v99 = vld [vmem:[#allocation2 + $0xb0] sm:$0xff]
    %v100 = vld [vmem:[#allocation2 + $0xb8] sm:$0xff]
    %v101 = vld [vmem:[#allocation2 + $0xc0] sm:$0xff]
    %v102 = vld [vmem:[#allocation2 + $0xc8] sm:$0xff]
    %v103 = vld [vmem:[#allocation2 + $0xd0] sm:$0xff]
    %v104 = vld [vmem:[#allocation2 + $0xd8] sm:$0xff]
    %v105 = vld [vmem:[#allocation2 + $0xe0] sm:$0xff]
    %v106 = vld [vmem:[#allocation2 + $0xe8] sm:$0xff]
    %v107 = vld [vmem:[#allocation2 + $0xf0] sm:$0xff]
    %v108 = vld [vmem:[#allocation2 + $0xf8] sm:$0xff]
    %v109 = vld [vmem:[#allocation3] sm:$0xf]
    %v110 = vld [vmem:[#allocation3 + $0x4] sm:$0xf]
    %v111 = vld [vmem:[#allocation3 + $0x8] sm:$0xf]
    %v112 = vld [vmem:[#allocation3 + $0xc] sm:$0xf]
    %v113 = vld [vmem:[#allocation3 + $0x10] sm:$0xf]
    %v114 = vld [vmem:[#allocation3 + $0x14] sm:$0xf]
    %v115 = vld [vmem:[#allocation3 + $0x18] sm:$0xf]
    %v116 = vld [vmem:[#allocation3 + $0x1c] sm:$0xf]
    %v117 = vld [vmem:[#allocation3 + $0x20] sm:$0xf]
    %v118 = vld [vmem:[#allocation3 + $0x24] sm:$0xf]
    %v119 = vld [vmem:[#allocation3 + $0x28] sm:$0xf]
    %v120 = vld [vmem:[#allocation3 + $0x2c] sm:$0xf]
    %v121 = vld [vmem:[#allocation3 + $0x30] sm:$0xf]
    %v122 = vld [vmem:[#allocation3 + $0x34] sm:$0xf]
    %v123 = vld [vmem:[#allocation3 + $0x38] sm:$0xf]
    %v124 = vld [vmem:[#allocation3 + $0x3c] sm:$0xf]
    %v125 = vld [vmem:[#allocation3 + $0x40] sm:$0xf]
    %v126 = vld [vmem:[#allocation3 + $0x44] sm:$0xf]
    %v127 = vld [vmem:[#allocation3 + $0x48] sm:$0xf]
    %v128 = vld [vmem:[#allocation3 + $0x4c] sm:$0xf]
    %v129 = vld [vmem:[#allocation3 + $0x50] sm:$0xf]
    %v130 = vld [vmem:[#allocation3 + $0x54] sm:$0xf]
    %v131 = vld [vmem:[#allocation3 + $0x58] sm:$0xf]
    %v132 = vld [vmem:[#allocation3 + $0x5c] sm:$0xf]
    %v133 = vld [vmem:[#allocation3 + $0x60] sm:$0xf]
    %v134 = vld [vmem:[#allocation3 + $0x64] sm:$0xf]
    %v135 = vld [vmem:[#allocation3 + $0x68] sm:$0xf]
    %v136 = vld [vmem:[#allocation3 + $0x6c] sm:$0xf]
    %v137 = vld [vmem:[#allocation3 + $0x70] sm:$0xf]
    %v138 = vld [vmem:[#allocation3 + $0x74] sm:$0xf]
    %v139 = vld [vmem:[#allocation3 + $0x78] sm:$0xf]
    %v140 = vld [vmem:[#allocation3 + $0x7c] sm:$0xf]
    %v141 = vld [vmem:[#allocation6] sm:$0xf]
    %v142 = vld [vmem:[#allocation6 + $0x4] sm:$0xf]
    %v143 = vld [vmem:[#allocation6 + $0x8] sm:$0xf]
    %v144 = vld [vmem:[#allocation6 + $0xc] sm:$0xf]
    %v145 = vld [vmem:[#allocation6 + $0x10] sm:$0xf]
    %v146 = vld [vmem:[#allocation6 + $0x14] sm:$0xf]
    %v147 = vld [vmem:[#allocation6 + $0x18] sm:$0xf]
    %v148 = vld [vmem:[#allocation6 + $0x1c] sm:$0xf]
    %v149 = vld [vmem:[#allocation6 + $0x20] sm:$0xf]
    %v150 = vld [vmem:[#allocation6 + $0x24] sm:$0xf]
    %v151 = vld [vmem:[#allocation6 + $0x28] sm:$0xf]
    %v152 = vld [vmem:[#allocation6 + $0x2c] sm:$0xf]
    %v153 = vld [vmem:[#allocation6 + $0x30] sm:$0xf]
    %v154 = vld [vmem:[#allocation6 + $0x34] sm:$0xf]
    %v155 = vld [vmem:[#allocation6 + $0x38] sm:$0xf]
    %v156 = vld [vmem:[#allocation6 + $0x3c] sm:$0xf]
    %v189 = vunpack.c.l.b16 %v109
    %v190 = vunpack.c.l.b16 %v110
    %v191 = vunpack.c.l.b16 %v111
    %v192 = vunpack.c.l.b16 %v112
    %v193 = vunpack.c.l.b16 %v113
    %v194 = vunpack.c.l.b16 %v114
    %v195 = vunpack.c.l.b16 %v115
    %v196 = vunpack.c.l.b16 %v116
    %v197 = vunpack.c.l.b16 %v117
    %v198 = vunpack.c.l.b16 %v118
    %v199 = vunpack.c.l.b16 %v119
    %v200 = vunpack.c.l.b16 %v120
    %v201 = vunpack.c.l.b16 %v121
    %v202 = vunpack.c.l.b16 %v122
    %v203 = vunpack.c.l.b16 %v123
    %v204 = vunpack.c.l.b16 %v124
    %v205 = vunpack.c.l.b16 %v125
    %v206 = vunpack.c.l.b16 %v126
    %v207 = vunpack.c.l.b16 %v127
    %v208 = vunpack.c.l.b16 %v128
    %v209 = vunpack.c.l.b16 %v129
    %v210 = vunpack.c.l.b16 %v130
    %v211 = vunpack.c.l.b16 %v131
    %v212 = vunpack.c.l.b16 %v132
    %v213 = vunpack.c.l.b16 %v133
    %v214 = vunpack.c.l.b16 %v134
    %v215 = vunpack.c.l.b16 %v135
    %v216 = vunpack.c.l.b16 %v136
    %v217 = vunpack.c.l.b16 %v137
    %v218 = vunpack.c.l.b16 %v138
    %v219 = vunpack.c.l.b16 %v139
    %v220 = vunpack.c.l.b16 %v140
    %v221 = vpack.c.b16 %v190, %v189
    %v222 = vpack.c.b16 %v192, %v191
    %v223 = vpack.c.b16 %v194, %v193
    %v224 = vpack.c.b16 %v196, %v195
    %v225 = vpack.c.b16 %v198, %v197
    %v226 = vpack.c.b16 %v200, %v199
    %v227 = vpack.c.b16 %v202, %v201
    %v228 = vpack.c.b16 %v204, %v203
    %v229 = vpack.c.b16 %v206, %v205
    %v230 = vpack.c.b16 %v208, %v207
    %v231 = vpack.c.b16 %v210, %v209
    %v232 = vpack.c.b16 %v212, %v211
    %v233 = vpack.c.b16 %v214, %v213
    %v234 = vpack.c.b16 %v216, %v215
    %v235 = vpack.c.b16 %v218, %v217
    %v236 = vpack.c.b16 %v220, %v219
    %v269 = vunpack.c.l.b16 %v141
    %v270 = vunpack.c.l.b16 %v142
    %v271 = vunpack.c.l.b16 %v143
    %v272 = vunpack.c.l.b16 %v144
    %v273 = vunpack.c.l.b16 %v145
    %v274 = vunpack.c.l.b16 %v146
    %v275 = vunpack.c.l.b16 %v147
    %v276 = vunpack.c.l.b16 %v148
    %v277 = vunpack.c.l.b16 %v149
    %v278 = vunpack.c.l.b16 %v150
    %v279 = vunpack.c.l.b16 %v151
    %v280 = vunpack.c.l.b16 %v152
    %v281 = vunpack.c.l.b16 %v153
    %v282 = vunpack.c.l.b16 %v154
    %v283 = vunpack.c.l.b16 %v155
    %v284 = vunpack.c.l.b16 %v156
    %v285 = vpack.c.b16 %v270, %v269
    %v286 = vpack.c.b16 %v272, %v271
    %v287 = vpack.c.b16 %v274, %v273
    %v288 = vpack.c.b16 %v276, %v275
    %v289 = vpack.c.b16 %v278, %v277
    %v290 = vpack.c.b16 %v280, %v279
    %v291 = vpack.c.b16 %v282, %v281
    %v292 = vpack.c.b16 %v284, %v283
    %301 = vmatprep.subr.bf16.mxu0 0
    %302 = vmatpush1.bf16.msra.mxu0 %v285
    %303 = vmatprep.subr.bf16.mxu0 0
    %304 = vmatpush1.bf16.msra.mxu0 %v286
    %305 = vmatprep.subr.bf16.mxu0 0
    %306 = vmatpush1.bf16.msra.mxu0 %v287
    %307 = vmatprep.subr.bf16.mxu0 0
    %308 = vmatpush1.bf16.msra.mxu0 %v288
    %309 = vmatprep.subr.bf16.mxu0 0
    %310 = vmatpush1.bf16.msra.mxu0 %v289
    %311 = vmatprep.subr.bf16.mxu0 0
    %312 = vmatpush1.bf16.msra.mxu0 %v290
    %313 = vmatprep.subr.bf16.mxu0 0
    %314 = vmatpush1.bf16.msra.mxu0 %v291
    %315 = vmatprep.subr.bf16.mxu0 0
    %316 = vmatpush1.bf16.msra.mxu0 %v292
    %317 = vmatprep.subr.bf16.mxu0 0
    %318 = vmatpush1.bf16.msra.mxu0 0
    %319 = vmatprep.subr.bf16.mxu0 0
    %320 = vmatpush1.bf16.msra.mxu0 0
    %321 = vmatprep.subr.bf16.mxu0 0
    %322 = vmatpush1.bf16.msra.mxu0 0
    %323 = vmatprep.subr.bf16.mxu0 0
    %324 = vmatpush1.bf16.msra.mxu0 0
    %325 = vmatprep.subr.bf16.mxu0 0
    %326 = vmatpush1.bf16.msra.mxu0 0
    %327 = vmatprep.subr.bf16.mxu0 0
    %328 = vmatpush1.bf16.msra.mxu0 0
    %329 = vmatprep.subr.bf16.mxu0 0
    %330 = vmatpush1.bf16.msra.mxu0 0
    %331 = vmatprep.subr.bf16.mxu0 0
    %332 = vmatpush1.bf16.msra.mxu0 0
    %333 = vmatprep.mubr.bf16.mxu0 0
    %334 = vmatmul.mubr.bf16.gmra.mrb[0].mxu0 %v221
    %v335 = vpop.f32.mrb[0].mxu0
    %v336 = vadd.f32 0.0, %v335
    %v337 = vpop.f32.mrb[0].mxu0
    %v338 = vpop.f32.mrb[0].mxu0
    %v339 = vadd.f32 0.0, %v338
    %v340 = vpop.f32.mrb[0].mxu0
    %341 = vmatprep.mubr.bf16.mxu0 0
    %342 = vmatmul.mubr.bf16.gmra.mrb[0].mxu0 %v222
    %v343 = vpop.f32.mrb[0].mxu0
    %v344 = vadd.f32 0.0, %v343
    %v345 = vpop.f32.mrb[0].mxu0
    %v346 = vpop.f32.mrb[0].mxu0
    %v347 = vadd.f32 0.0, %v346
    %v348 = vpop.f32.mrb[0].mxu0
    %349 = vmatprep.mubr.bf16.mxu0 0
    %350 = vmatmul.mubr.bf16.gmra.mrb[0].mxu0 %v223
    %v351 = vpop.f32.mrb[0].mxu0
    %v352 = vadd.f32 0.0, %v351
    %v353 = vpop.f32.mrb[0].mxu0
    %v354 = vpop.f32.mrb[0].mxu0
    %v355 = vadd.f32 0.0, %v354
    %v356 = vpop.f32.mrb[0].mxu0
    %357 = vmatprep.mubr.bf16.mxu0 0
    %358 = vmatmul.mubr.bf16.gmra.mrb[0].mxu0 %v224
    %v359 = vpop.f32.mrb[0].mxu0
    %v360 = vadd.f32 0.0, %v359
    %v361 = vpop.f32.mrb[0].mxu0
    %v362 = vpop.f32.mrb[0].mxu0
    %v363 = vadd.f32 0.0, %v362
    %v364 = vpop.f32.mrb[0].mxu0
    %365 = vmatprep.mubr.bf16.mxu0 0
    %366 = vmatmul.mubr.bf16.gmra.mrb[0].mxu0 %v225
    %v367 = vpop.f32.mrb[0].mxu0
    %v368 = vadd.f32 0.0, %v367
    %v369 = vpop.f32.mrb[0].mxu0
    %v370 = vpop.f32.mrb[0].mxu0
    %v371 = vadd.f32 0.0, %v370
    %v372 = vpop.f32.mrb[0].mxu0
    %373 = vmatprep.mubr.bf16.mxu0 0
    %374 = vmatmul.mubr.bf16.gmra.mrb[0].mxu0 %v226
    %v375 = vpop.f32.mrb[0].mxu0
    %v376 = vadd.f32 0.0, %v375
    %v377 = vpop.f32.mrb[0].mxu0
    %v378 = vpop.f32.mrb[0].mxu0
    %v379 = vadd.f32 0.0, %v378
    %v380 = vpop.f32.mrb[0].mxu0
    %381 = vmatprep.mubr.bf16.mxu0 0
    %382 = vmatmul.mubr.bf16.gmra.mrb[0].mxu0 %v227
    %v383 = vpop.f32.mrb[0].mxu0
    %v384 = vadd.f32 0.0, %v383
    %v385 = vpop.f32.mrb[0].mxu0
    %v386 = vpop.f32.mrb[0].mxu0
    %v387 = vadd.f32 0.0, %v386
    %v388 = vpop.f32.mrb[0].mxu0
    %389 = vmatprep.mubr.bf16.mxu0 0
    %390 = vmatmul.mubr.bf16.gmra.mrb[0].mxu0 %v228
    %v391 = vpop.f32.mrb[0].mxu0
    %v392 = vadd.f32 0.0, %v391
    %v393 = vpop.f32.mrb[0].mxu0
    %v394 = vpop.f32.mrb[0].mxu0
    %v395 = vadd.f32 0.0, %v394
    %v396 = vpop.f32.mrb[0].mxu0
    %397 = vmatprep.mubr.bf16.mxu0 0
    %398 = vmatmul.mubr.bf16.gmra.mrb[0].mxu0 %v229
    %v399 = vpop.f32.mrb[0].mxu0
    %v400 = vadd.f32 0.0, %v399
    %v401 = vpop.f32.mrb[0].mxu0
    %v402 = vpop.f32.mrb[0].mxu0
    %v403 = vadd.f32 0.0, %v402
    %v404 = vpop.f32.mrb[0].mxu0
    %405 = vmatprep.mubr.bf16.mxu0 0
    %406 = vmatmul.mubr.bf16.gmra.mrb[0].mxu0 %v230
    %v407 = vpop.f32.mrb[0].mxu0
    %v408 = vadd.f32 0.0, %v407
    %v409 = vpop.f32.mrb[0].mxu0
    %v410 = vpop.f32.mrb[0].mxu0
    %v411 = vadd.f32 0.0, %v410
    %v412 = vpop.f32.mrb[0].mxu0
    %413 = vmatprep.mubr.bf16.mxu0 0
    %414 = vmatmul.mubr.bf16.gmra.mrb[0].mxu0 %v231
    %v415 = vpop.f32.mrb[0].mxu0
    %v416 = vadd.f32 0.0, %v415
    %v417 = vpop.f32.mrb[0].mxu0
    %v418 = vpop.f32.mrb[0].mxu0
    %v419 = vadd.f32 0.0, %v418
    %v420 = vpop.f32.mrb[0].mxu0
    %421 = vmatprep.mubr.bf16.mxu0 0
    %422 = vmatmul.mubr.bf16.gmra.mrb[0].mxu0 %v232
    %v423 = vpop.f32.mrb[0].mxu0
    %v424 = vadd.f32 0.0, %v423
    %v425 = vpop.f32.mrb[0].mxu0
    %v426 = vpop.f32.mrb[0].mxu0
    %v427 = vadd.f32 0.0, %v426
    %v428 = vpop.f32.mrb[0].mxu0
    %429 = vmatprep.mubr.bf16.mxu0 0
    %430 = vmatmul.mubr.bf16.gmra.mrb[0].mxu0 %v233
    %v431 = vpop.f32.mrb[0].mxu0
    %v432 = vadd.f32 0.0, %v431
    %v433 = vpop.f32.mrb[0].mxu0
    %v434 = vpop.f32.mrb[0].mxu0
    %v435 = vadd.f32 0.0, %v434
    %v436 = vpop.f32.mrb[0].mxu0
    %437 = vmatprep.mubr.bf16.mxu0 0
    %438 = vmatmul.mubr.bf16.gmra.mrb[0].mxu0 %v234
    %v439 = vpop.f32.mrb[0].mxu0
    %v440 = vadd.f32 0.0, %v439
    %v441 = vpop.f32.mrb[0].mxu0
    %v442 = vpop.f32.mrb[0].mxu0
    %v443 = vadd.f32 0.0, %v442
    %v444 = vpop.f32.mrb[0].mxu0
    %445 = vmatprep.mubr.bf16.mxu0 0
    %446 = vmatmul.mubr.bf16.gmra.mrb[0].mxu0 %v235
    %v447 = vpop.f32.mrb[0].mxu0
    %v448 = vadd.f32 0.0, %v447
    %v449 = vpop.f32.mrb[0].mxu0
    %v450 = vpop.f32.mrb[0].mxu0
    %v451 = vadd.f32 0.0, %v450
    %v452 = vpop.f32.mrb[0].mxu0
    %453 = vmatprep.mubr.bf16.mxu0 0
    %454 = vmatmul.mubr.bf16.gmra.mrb[0].mxu0 %v236
    %v455 = vpop.f32.mrb[0].mxu0
    %v456 = vadd.f32 0.0, %v455
    %v457 = vpop.f32.mrb[0].mxu0
    %v458 = vpop.f32.mrb[0].mxu0
    %v459 = vadd.f32 0.0, %v458
    %v460 = vpop.f32.mrb[0].mxu0
    %461 = vdwg.mxu0
    %v462 = vadd.f32 %v77, %v336
    %v463 = vadd.f32 %v78, %v339
    %v464 = vadd.f32 %v79, %v344
    %v465 = vadd.f32 %v80, %v347
    %v466 = vadd.f32 %v81, %v352
    %v467 = vadd.f32 %v82, %v355
    %v468 = vadd.f32 %v83, %v360
    %v469 = vadd.f32 %v84, %v363
    %v470 = vadd.f32 %v85, %v368
    %v471 = vadd.f32 %v86, %v371
    %v472 = vadd.f32 %v87, %v376
    %v473 = vadd.f32 %v88, %v379
    %v474 = vadd.f32 %v89, %v384
    %v475 = vadd.f32 %v90, %v387
    %v476 = vadd.f32 %v91, %v392
    %v477 = vadd.f32 %v92, %v395
    %v478 = vadd.f32 %v93, %v400
    %v479 = vadd.f32 %v94, %v403
    %v480 = vadd.f32 %v95, %v408
    %v481 = vadd.f32 %v96, %v411
    %v482 = vadd.f32 %v97, %v416
    %v483 = vadd.f32 %v98, %v419
    %v484 = vadd.f32 %v99, %v424
    %v485 = vadd.f32 %v100, %v427
    %v486 = vadd.f32 %v101, %v432
    %v487 = vadd.f32 %v102, %v435
    %v488 = vadd.f32 %v103, %v440
    %v489 = vadd.f32 %v104, %v443
    %v490 = vadd.f32 %v105, %v448
    %v491 = vadd.f32 %v106, %v451
    %v492 = vadd.f32 %v107, %v456
    %v493 = vadd.f32 %v108, %v459
    %494 = vst [vmem:[#allocation2] sm:$0xff] %v462
    %495 = vst [vmem:[#allocation2 + $0x8] sm:$0xff] %v463
    %496 = vst [vmem:[#allocation2 + $0x10] sm:$0xff] %v464
    %497 = vst [vmem:[#allocation2 + $0x18] sm:$0xff] %v465
    %498 = vst [vmem:[#allocation2 + $0x20] sm:$0xff] %v466
    %499 = vst [vmem:[#allocation2 + $0x28] sm:$0xff] %v467
    %500 = vst [vmem:[#allocation2 + $0x30] sm:$0xff] %v468
    %501 = vst [vmem:[#allocation2 + $0x38] sm:$0xff] %v469
    %502 = vst [vmem:[#allocation2 + $0x40] sm:$0xff] %v470
    %503 = vst [vmem:[#allocation2 + $0x48] sm:$0xff] %v471
    %504 = vst [vmem:[#allocation2 + $0x50] sm:$0xff] %v472
    %505 = vst [vmem:[#allocation2 + $0x58] sm:$0xff] %v473
    %506 = vst [vmem:[#allocation2 + $0x60] sm:$0xff] %v474
    %507 = vst [vmem:[#allocation2 + $0x68] sm:$0xff] %v475
    %508 = vst [vmem:[#allocation2 + $0x70] sm:$0xff] %v476
    %509 = vst [vmem:[#allocation2 + $0x78] sm:$0xff] %v477
    %510 = vst [vmem:[#allocation2 + $0x80] sm:$0xff] %v478
    %511 = vst [vmem:[#allocation2 + $0x88] sm:$0xff] %v479
    %512 = vst [vmem:[#allocation2 + $0x90] sm:$0xff] %v480
    %513 = vst [vmem:[#allocation2 + $0x98] sm:$0xff] %v481
    %514 = vst [vmem:[#allocation2 + $0xa0] sm:$0xff] %v482
    %515 = vst [vmem:[#allocation2 + $0xa8] sm:$0xff] %v483
    %516 = vst [vmem:[#allocation2 + $0xb0] sm:$0xff] %v484
    %517 = vst [vmem:[#allocation2 + $0xb8] sm:$0xff] %v485
    %518 = vst [vmem:[#allocation2 + $0xc0] sm:$0xff] %v486
    %519 = vst [vmem:[#allocation2 + $0xc8] sm:$0xff] %v487
    %520 = vst [vmem:[#allocation2 + $0xd0] sm:$0xff] %v488
    %521 = vst [vmem:[#allocation2 + $0xd8] sm:$0xff] %v489
    %522 = vst [vmem:[#allocation2 + $0xe0] sm:$0xff] %v490
    %523 = vst [vmem:[#allocation2 + $0xe8] sm:$0xff] %v491
    %524 = vst [vmem:[#allocation2 + $0xf0] sm:$0xff] %v492
    %525 = vst [vmem:[#allocation2 + $0xf8] sm:$0xff] %v493
    // Predicated region
    $region22: #{tpu_custom_call.1} parent=1 // pred_check
      %p526 = pneg %p41
    $region23: #{tpu_custom_call.1} parent=1 // pred_check_branch
      %528 = sbr.rel (%p526) target = $region25
    $region24: #{tpu_custom_call.1} parent=1 // pred_region
      %v529 = vld [vmem:[#allocation2] sm:$0xff]
      %v530 = vld [vmem:[#allocation2 + $0x8] sm:$0xff]
      %v531 = vld [vmem:[#allocation2 + $0x10] sm:$0xff]
      %v532 = vld [vmem:[#allocation2 + $0x18] sm:$0xff]
      %v533 = vld [vmem:[#allocation2 + $0x20] sm:$0xff]
      %v534 = vld [vmem:[#allocation2 + $0x28] sm:$0xff]
      %v535 = vld [vmem:[#allocation2 + $0x30] sm:$0xff]
      %v536 = vld [vmem:[#allocation2 + $0x38] sm:$0xff]
      %v537 = vld [vmem:[#allocation2 + $0x40] sm:$0xff]
      %v538 = vld [vmem:[#allocation2 + $0x48] sm:$0xff]
      %v539 = vld [vmem:[#allocation2 + $0x50] sm:$0xff]
      %v540 = vld [vmem:[#allocation2 + $0x58] sm:$0xff]
      %v541 = vld [vmem:[#allocation2 + $0x60] sm:$0xff]
      %v542 = vld [vmem:[#allocation2 + $0x68] sm:$0xff]
      %v543 = vld [vmem:[#allocation2 + $0x70] sm:$0xff]
      %v544 = vld [vmem:[#allocation2 + $0x78] sm:$0xff]
      %v545 = vld [vmem:[#allocation2 + $0x80] sm:$0xff]
      %v546 = vld [vmem:[#allocation2 + $0x88] sm:$0xff]
      %v547 = vld [vmem:[#allocation2 + $0x90] sm:$0xff]
      %v548 = vld [vmem:[#allocation2 + $0x98] sm:$0xff]
      %v549 = vld [vmem:[#allocation2 + $0xa0] sm:$0xff]
      %v550 = vld [vmem:[#allocation2 + $0xa8] sm:$0xff]
      %v551 = vld [vmem:[#allocation2 + $0xb0] sm:$0xff]
      %v552 = vld [vmem:[#allocation2 + $0xb8] sm:$0xff]
      %v553 = vld [vmem:[#allocation2 + $0xc0] sm:$0xff]
      %v554 = vld [vmem:[#allocation2 + $0xc8] sm:$0xff]
      %v555 = vld [vmem:[#allocation2 + $0xd0] sm:$0xff]
      %v556 = vld [vmem:[#allocation2 + $0xd8] sm:$0xff]
      %v557 = vld [vmem:[#allocation2 + $0xe0] sm:$0xff]
      %v558 = vld [vmem:[#allocation2 + $0xe8] sm:$0xff]
      %v559 = vld [vmem:[#allocation2 + $0xf0] sm:$0xff]
      %v560 = vld [vmem:[#allocation2 + $0xf8] sm:$0xff]
      %v561 = vpack.c.bf16 %v530, %v529
      %v562 = vpack.c.bf16 %v532, %v531
      %v563 = vpack.c.bf16 %v534, %v533
      %v564 = vpack.c.bf16 %v536, %v535
      %v565 = vpack.c.bf16 %v538, %v537
      %v566 = vpack.c.bf16 %v540, %v539
      %v567 = vpack.c.bf16 %v542, %v541
      %v568 = vpack.c.bf16 %v544, %v543
      %v569 = vpack.c.bf16 %v546, %v545
      %v570 = vpack.c.bf16 %v548, %v547
      %v571 = vpack.c.bf16 %v550, %v549
      %v572 = vpack.c.bf16 %v552, %v551
      %v573 = vpack.c.bf16 %v554, %v553
      %v574 = vpack.c.bf16 %v556, %v555
      %v575 = vpack.c.bf16 %v558, %v557
      %v576 = vpack.c.bf16 %v560, %v559
      %v593 = vunpack.c.l.b16 %v561
      %v594 = vunpack.c.h.b16 %v561
      %v595 = vunpack.c.l.b16 %v562
      %v596 = vunpack.c.h.b16 %v562
      %v597 = vunpack.c.l.b16 %v563
      %v598 = vunpack.c.h.b16 %v563
      %v599 = vunpack.c.l.b16 %v564
      %v600 = vunpack.c.h.b16 %v564
      %v601 = vunpack.c.l.b16 %v565
      %v602 = vunpack.c.h.b16 %v565
      %v603 = vunpack.c.l.b16 %v566
      %v604 = vunpack.c.h.b16 %v566
      %v605 = vunpack.c.l.b16 %v567
      %v606 = vunpack.c.h.b16 %v567
      %v607 = vunpack.c.l.b16 %v568
      %v608 = vunpack.c.h.b16 %v568
      %v609 = vunpack.c.l.b16 %v569
      %v610 = vunpack.c.h.b16 %v569
      %v611 = vunpack.c.l.b16 %v570
      %v612 = vunpack.c.h.b16 %v570
      %v613 = vunpack.c.l.b16 %v571
      %v614 = vunpack.c.h.b16 %v571
      %v615 = vunpack.c.l.b16 %v572
      %v616 = vunpack.c.h.b16 %v572
      %v617 = vunpack.c.l.b16 %v573
      %v618 = vunpack.c.h.b16 %v573
      %v619 = vunpack.c.l.b16 %v574
      %v620 = vunpack.c.h.b16 %v574
      %v621 = vunpack.c.l.b16 %v575
      %v622 = vunpack.c.h.b16 %v575
      %v623 = vunpack.c.l.b16 %v576
      %v624 = vunpack.c.h.b16 %v576
      %v625 = vpack.c.b16 %v593, %v593
      %v626 = vpack.c.b16 %v594, %v594
      %v627 = vpack.c.b16 %v595, %v595
      %v628 = vpack.c.b16 %v596, %v596
      %v629 = vpack.c.b16 %v597, %v597
      %v630 = vpack.c.b16 %v598, %v598
      %v631 = vpack.c.b16 %v599, %v599
      %v632 = vpack.c.b16 %v600, %v600
      %v633 = vpack.c.b16 %v601, %v601
      %v634 = vpack.c.b16 %v602, %v602
      %v635 = vpack.c.b16 %v603, %v603
      %v636 = vpack.c.b16 %v604, %v604
      %v637 = vpack.c.b16 %v605, %v605
      %v638 = vpack.c.b16 %v606, %v606
      %v639 = vpack.c.b16 %v607, %v607
      %v640 = vpack.c.b16 %v608, %v608
      %v641 = vpack.c.b16 %v609, %v609
      %v642 = vpack.c.b16 %v610, %v610
      %v643 = vpack.c.b16 %v611, %v611
      %v644 = vpack.c.b16 %v612, %v612
      %v645 = vpack.c.b16 %v613, %v613
      %v646 = vpack.c.b16 %v614, %v614
      %v647 = vpack.c.b16 %v615, %v615
      %v648 = vpack.c.b16 %v616, %v616
      %v649 = vpack.c.b16 %v617, %v617
      %v650 = vpack.c.b16 %v618, %v618
      %v651 = vpack.c.b16 %v619, %v619
      %v652 = vpack.c.b16 %v620, %v620
      %v653 = vpack.c.b16 %v621, %v621
      %v654 = vpack.c.b16 %v622, %v622
      %v655 = vpack.c.b16 %v623, %v623
      %v656 = vpack.c.b16 %v624, %v624
      %689 = vst [vmem:[#allocation8] sm:$0xf] %v625
      %690 = vst [vmem:[#allocation8 + $0x4] sm:$0xf] %v626
      %691 = vst [vmem:[#allocation8 + $0x8] sm:$0xf] %v627
      %692 = vst [vmem:[#allocation8 + $0xc] sm:$0xf] %v628
      %693 = vst [vmem:[#allocation8 + $0x10] sm:$0xf] %v629
      %694 = vst [vmem:[#allocation8 + $0x14] sm:$0xf] %v630
      %695 = vst [vmem:[#allocation8 + $0x18] sm:$0xf] %v631
      %696 = vst [vmem:[#allocation8 + $0x1c] sm:$0xf] %v632
      %697 = vst [vmem:[#allocation8 + $0x20] sm:$0xf] %v633
      %698 = vst [vmem:[#allocation8 + $0x24] sm:$0xf] %v634
      %699 = vst [vmem:[#allocation8 + $0x28] sm:$0xf] %v635
      %700 = vst [vmem:[#allocation8 + $0x2c] sm:$0xf] %v636
      %701 = vst [vmem:[#allocation8 + $0x30] sm:$0xf] %v637
      %702 = vst [vmem:[#allocation8 + $0x34] sm:$0xf] %v638
      %703 = vst [vmem:[#allocation8 + $0x38] sm:$0xf] %v639
      %704 = vst [vmem:[#allocation8 + $0x3c] sm:$0xf] %v640
      %705 = vst [vmem:[#allocation8 + $0x40] sm:$0xf] %v641
      %706 = vst [vmem:[#allocation8 + $0x44] sm:$0xf] %v642
      %707 = vst [vmem:[#allocation8 + $0x48] sm:$0xf] %v643
      %708 = vst [vmem:[#allocation8 + $0x4c] sm:$0xf] %v644
      %709 = vst [vmem:[#allocation8 + $0x50] sm:$0xf] %v645
      %710 = vst [vmem:[#allocation8 + $0x54] sm:$0xf] %v646
      %711 = vst [vmem:[#allocation8 + $0x58] sm:$0xf] %v647
      %712 = vst [vmem:[#allocation8 + $0x5c] sm:$0xf] %v648
      %713 = vst [vmem:[#allocation8 + $0x60] sm:$0xf] %v649
      %714 = vst [vmem:[#allocation8 + $0x64] sm:$0xf] %v650
      %715 = vst [vmem:[#allocation8 + $0x68] sm:$0xf] %v651
      %716 = vst [vmem:[#allocation8 + $0x6c] sm:$0xf] %v652
      %717 = vst [vmem:[#allocation8 + $0x70] sm:$0xf] %v653
      %718 = vst [vmem:[#allocation8 + $0x74] sm:$0xf] %v654
      %719 = vst [vmem:[#allocation8 + $0x78] sm:$0xf] %v655
      %720 = vst [vmem:[#allocation8 + $0x7c] sm:$0xf] %v656
    $region25: #{tpu_custom_call.1} parent=1 // pred_fallthru
      _
    // Predicated region
    $region26: #{tpu_custom_call.1} parent=1 // pred_check
      _
    $region27: #{tpu_custom_call.1} parent=1 // pred_check_branch
      %722 = sbr.rel (0) target = $region29
    $region28: #{tpu_custom_call.1} parent=1 // pred_region
      %s724 = ssub.s32 2048, 2048
      %725 = vsyncadd [#allocation5], %s724
      %s726 = sshll.u32 [#allocation8], 4
      %s727 = int_to_ptr.vmem [resolvable:$true] %s726
      %732 = dma.vmem_to_hbm [thread:$0]  %s727, 2048, %s2, [#allocation5], 64, 64, 4
    $region29: #{tpu_custom_call.1} parent=1 // pred_fallthru
      _
    // Predicated region
    $region30: #{tpu_custom_call.1} parent=1 // pred_check
      _
    $region31: #{tpu_custom_call.1} parent=1 // pred_check_branch
      %734 = sbr.rel (0) target = $region33
    $region32: #{tpu_custom_call.1} parent=1 // pred_region
      %735 = dma.done [#allocation5], 2048
    $region33: #{tpu_custom_call.1} parent=1 // pred_fallthru
      _
    %736 = vsyncpa [#allocation4], 1
    %737 = vsyncpa [#allocation7], 1
    %738 = vsyncpa [#allocation5], 1

</llo_original>
